<compile_context>
chip_gen: v6e
topology: v6e:2x2x1
jax: 0.10.0
libtpu: 0.0.40
codegen_flags: <defaults>
</compile_context>

<pallas_src>
import jax
import jax.numpy as jnp
from jax.experimental import pallas as pl
from jax.experimental.pallas import tpu as pltpu

LN_EPS = 1e-5  # PyTorch nn.LayerNorm default


def _round_up(x, m):
    return ((x + m - 1) // m) * m


def _nws_kernel(w_ref,                             # SMEM (2,): [audio_weight, text_weight]
                a_ref, t_ref,                      # VMEM (TB, Ea), (TB, Et) activation tiles
                ga_ref, ba_ref, Wa_ref, bwa_ref,   # audio LN gamma/beta, proj W (Ea,Bnp), bias (1,Bnp)
                gt_ref, bt_ref, Wt_ref, bwt_ref,   # text  LN gamma/beta, proj W (Et,Bnp), bias (1,Bnp)
                fus_ref, ao_ref, to_ref):          # outputs (TB, Bnp)
    def ln_proj(x_ref, g_ref, b_ref, W_ref, bias_ref):
        # Upcast activations to f32 for the LayerNorm statistics only.
        x = x_ref[...].astype(jnp.float32)
        inv_d = jnp.float32(1.0 / x.shape[-1])
        # Single-pass statistics: E[x] and E[x^2]  ->  var = E[x^2] - E[x]^2.
        mean = jnp.sum(x, axis=-1, keepdims=True) * inv_d
        mean2 = jnp.sum(x * x, axis=-1, keepdims=True) * inv_d
        var = jnp.maximum(mean2 - mean * mean, 0.0)
        xn = (x - mean) * jax.lax.rsqrt(var + LN_EPS)
        xn = xn * g_ref[...].astype(jnp.float32) + b_ref[...].astype(jnp.float32)
        # Feed the MXU in the weight's native dtype (bf16 weights -> bf16 MXU
        # path with f32 accumulation; f32 weights -> no-op cast).
        W = W_ref[...]
        y = jnp.dot(xn.astype(W.dtype), W, preferred_element_type=jnp.float32)
        return y + bias_ref[...].astype(jnp.float32)

    a = ln_proj(a_ref, ga_ref, ba_ref, Wa_ref, bwa_ref)
    t = ln_proj(t_ref, gt_ref, bt_ref, Wt_ref, bwt_ref)

    wa = w_ref[0]
    wt = w_ref[1]
    ao_ref[...] = a.astype(ao_ref.dtype)
    to_ref[...] = t.astype(to_ref.dtype)
    fus_ref[...] = (wa * a + wt * t).astype(fus_ref.dtype)


def normalized_weighted_sum(embeds, params, *, block_b=512):
    """embeds: tuple (audio_emb [B, Ea], text_emb [B, Et]); params: module weights."""
    assert isinstance(embeds, tuple), f"Expected tuple of embeddings, got {type(embeds)}"
    assert len(embeds) == 2, f"Expected 2 embeddings, got {len(embeds)}"
    audio_emb, text_emb = embeds
    B, Ea = audio_emb.shape
    _, Et = text_emb.shape
    Bn = params["audio_proj_weight"].shape[0]
    out_dtype = audio_emb.dtype

    # ---- one-time parameter layout plumbing (tiny arrays) -------------------
    # PyTorch Linear weight is (out, in) -> transpose to (in, out) so the
    # kernel does x @ W.  Pad the bottleneck dim to a multiple of 128 so the
    # output stores are lane-dense (unmasked vst); pad columns are zero and
    # sliced off after the call.
    Bn_pad = _round_up(Bn, 128)
    WaT = jnp.transpose(params["audio_proj_weight"])            # (Ea, Bn)
    WtT = jnp.transpose(params["text_proj_weight"])             # (Et, Bn)
    bwa = params["audio_proj_bias"].reshape(1, Bn)
    bwt = params["text_proj_bias"].reshape(1, Bn)
    if Bn_pad != Bn:
        col_pad = ((0, 0), (0, Bn_pad - Bn))
        WaT = jnp.pad(WaT, col_pad)
        WtT = jnp.pad(WtT, col_pad)
        bwa = jnp.pad(bwa, col_pad)
        bwt = jnp.pad(bwt, col_pad)
    ga = params["audio_ln_weight"].reshape(1, Ea)
    ba = params["audio_ln_bias"].reshape(1, Ea)
    gt = params["text_ln_weight"].reshape(1, Et)
    bt = params["text_ln_bias"].reshape(1, Et)
    scalars = jnp.stack([params["audio_weight"],
                         params["text_weight"]]).astype(jnp.float32)   # (2,) -> SMEM

    # ---- batch tiling --------------------------------------------------------
    in_bytes = audio_emb.dtype.itemsize
    out_bytes = jnp.dtype(out_dtype).itemsize
    align = 16 if in_bytes == 2 else 8          # bf16 packs 16 rows / sublane-pair
    block_b = max(align, _round_up(block_b, align))
    # Keep the grid >= 2 steps when B allows it (both v7x TensorCores busy),
    # otherwise one tile that covers the whole (small) batch.
    TB = min(block_b, _round_up(pl.cdiv(B, 2), align))

    # VMEM budget: double-buffered activation tiles + double-buffered outputs
    # + (double-buffered but never re-DMA'd) resident params.  44 MiB target
    # is safe on v7x's 64 MiB physical VMEM and trivially on v5e/v6e.
    def vmem_need(tb):
        acts = 2 * tb * (Ea + Et) * in_bytes
        outs = 2 * 3 * tb * Bn_pad * out_bytes
        par = 2 * ((Ea + Et) * Bn_pad + 2 * (Ea + Et) + 2 * Bn_pad) * 4
        return acts + outs + par

    VMEM_TARGET = 44 * 1024 * 1024
    while TB > align and vmem_need(TB) > VMEM_TARGET:
        TB = max(align, _round_up(TB // 2, align))
    vmem_limit = int(min(max(vmem_need(TB) + (8 << 20), 32 << 20), 64 << 20))

    grid = (pl.cdiv(B, TB),)   # ragged final block handled by Pallas; no jnp.pad copy

    row = lambda i: (i, 0)     # tiled over batch
    rep = lambda i: (0, 0)     # parameters: same block every step -> stay resident
    out_spec = pl.BlockSpec((TB, Bn_pad), row)

    cost = pl.CostEstimate(
        flops=int(2 * B * (Ea + Et) * Bn_pad + 10 * B * (Ea + Et)),
        transcendentals=int(2 * B),
        bytes_accessed=int(B * (Ea + Et) * in_bytes
                           + 3 * B * Bn_pad * out_bytes
                           + (Ea + Et) * Bn_pad * 4),
    )

    fus, ao, to = pl.pallas_call(
        _nws_kernel,
        out_shape=(jax.ShapeDtypeStruct((B, Bn_pad), out_dtype),) * 3,
        grid=grid,
        in_specs=[
            pl.BlockSpec(memory_space=pltpu.MemorySpace.SMEM),  # fusion scalars
            pl.BlockSpec((TB, Ea), row),                        # audio activations
            pl.BlockSpec((TB, Et), row),                        # text activations
            pl.BlockSpec((1, Ea), rep), pl.BlockSpec((1, Ea), rep),       # audio LN
            pl.BlockSpec((Ea, Bn_pad), rep), pl.BlockSpec((1, Bn_pad), rep),  # audio Linear
            pl.BlockSpec((1, Et), rep), pl.BlockSpec((1, Et), rep),       # text LN
            pl.BlockSpec((Et, Bn_pad), rep), pl.BlockSpec((1, Bn_pad), rep),  # text Linear
        ],
        out_specs=(out_spec, out_spec, out_spec),
        compiler_params=pltpu.CompilerParams(
            dimension_semantics=("parallel",),     # megacore sharding on v7x
            vmem_limit_bytes=vmem_limit),
        cost_estimate=cost,
    )(scalars, audio_emb, text_emb, ga, ba, WaT, bwa, gt, bt, WtT, bwt)

    if Bn_pad != Bn:
        fus, ao, to = fus[:, :Bn], ao[:, :Bn], to[:, :Bn]
    return {"fusion_emb": fus, "audio_emb": ao, "text_emb": to}


# --------------------------- pure-JAX reference ---------------------------
def _reference(embeds, p):
    audio_emb, text_emb = embeds

    def ln(x, g, b):
        x = x.astype(jnp.float32)
        m = jnp.mean(x, axis=-1, keepdims=True)
        v = jnp.mean((x - m) ** 2, axis=-1, keepdims=True)
        return (x - m) * jax.lax.rsqrt(v + LN_EPS) * g + b

    a = ln(audio_emb, p["audio_ln_weight"], p["audio_ln_bias"]) @ p["audio_proj_weight"].T \
        + p["audio_proj_bias"]
    t = ln(text_emb, p["text_ln_weight"], p["text_ln_bias"]) @ p["text_proj_weight"].T \
        + p["text_proj_bias"]
    return {"fusion_emb": p["audio_weight"] * a + p["text_weight"] * t,
            "audio_emb": a, "text_emb": t}


if __name__ == "__main__":
    key = jax.random.PRNGKey(0)
    Ea, Et, Bn = 32, 48, 32
    ks = jax.random.split(key, 12)

    params = {
        "audio_ln_weight": 1.0 + 0.1 * jax.random.normal(ks[2], (Ea,), jnp.float32),
        "audio_ln_bias": 0.1 * jax.random.normal(ks[3], (Ea,), jnp.float32),
        "audio_proj_weight": jax.random.normal(ks[4], (Bn, Ea), jnp.float32) / jnp.sqrt(Ea),
        "audio_proj_bias": 0.1 * jax.random.normal(ks[5], (Bn,), jnp.float32),
        "text_ln_weight": 1.0 + 0.1 * jax.random.normal(ks[6], (Et,), jnp.float32),
        "text_ln_bias": 0.1 * jax.random.normal(ks[7], (Et,), jnp.float32),
        "text_proj_weight": jax.random.normal(ks[8], (Bn, Et), jnp.float32) / jnp.sqrt(Et),
        "text_proj_bias": 0.1 * jax.random.normal(ks[9], (Bn,), jnp.float32),
        "audio_weight": jnp.float32(1.3),
        "text_weight": jnp.float32(0.7),
    }

    # Case 1: tiny batch (single ragged block).  Case 2: multi-step grid with a
    # ragged final block (exercises the cdiv / partial-block path).
    for B, ka, kt in ((6, ks[0], ks[1]), (40, ks[10], ks[11])):
        audio_emb = jax.random.normal(ka, (B, Ea), jnp.float32)
        text_emb = jax.random.normal(kt, (B, Et), jnp.float32)

        out = normalized_weighted_sum((audio_emb, text_emb), params)
        out = jax.tree_util.tree_map(jax.block_until_ready, out)

        ref = _reference((audio_emb, text_emb), params)
        for k in ("fusion_emb", "audio_emb", "text_emb"):
            assert out[k].shape == (B, Bn), f"bad shape for {k}: {out[k].shape}"
            assert jnp.allclose(out[k], ref[k], atol=1e-4, rtol=1e-4), (
                f"mismatch {k} (B={B}): max err "
                f"{jnp.max(jnp.abs(out[k] - ref[k]))}")

    print("KERNEL_OK")
</pallas_src>

<mosaic_0001>
module attributes {stable_mosaic.version = 11 : i64} {
  func.func @_nws_kernel(%arg0: i32, %arg1: memref<2xf32, #tpu.memory_space<smem>>, %arg2: memref<8x32xf32, #tpu.memory_space<vmem>>, %arg3: memref<8x48xf32, #tpu.memory_space<vmem>>, %arg4: memref<1x32xf32, #tpu.memory_space<vmem>>, %arg5: memref<1x32xf32, #tpu.memory_space<vmem>>, %arg6: memref<32x128xf32, #tpu.memory_space<vmem>>, %arg7: memref<1x128xf32, #tpu.memory_space<vmem>>, %arg8: memref<1x48xf32, #tpu.memory_space<vmem>>, %arg9: memref<1x48xf32, #tpu.memory_space<vmem>>, %arg10: memref<48x128xf32, #tpu.memory_space<vmem>>, %arg11: memref<1x128xf32, #tpu.memory_space<vmem>>, %arg12: memref<8x128xf32, #tpu.memory_space<vmem>>, %arg13: memref<8x128xf32, #tpu.memory_space<vmem>>, %arg14: memref<8x128xf32, #tpu.memory_space<vmem>>) attributes {dimension_semantics = [#tpu.dimension_semantics<parallel>], iteration_bounds = array<i64: 1>, scalar_prefetch = 0 : i64, scratch_operands = 0 : i64, tpu.core_type = #tpu.core_type<tc>, window_params = [{transform_indices = @transform_0, window_bounds = array<i64: 2>}, {transform_indices = @transform_1, window_bounds = array<i64: 8, 32>}, {transform_indices = @transform_2, window_bounds = array<i64: 8, 48>}, {pipeline_mode = #tpu.pipeline_mode<synchronous>, transform_indices = @transform_3, window_bounds = array<i64: 1, 32>}, {pipeline_mode = #tpu.pipeline_mode<synchronous>, transform_indices = @transform_4, window_bounds = array<i64: 1, 32>}, {pipeline_mode = #tpu.pipeline_mode<synchronous>, transform_indices = @transform_5, window_bounds = array<i64: 32, 128>}, {pipeline_mode = #tpu.pipeline_mode<synchronous>, transform_indices = @transform_6, window_bounds = array<i64: 1, 128>}, {pipeline_mode = #tpu.pipeline_mode<synchronous>, transform_indices = @transform_7, window_bounds = array<i64: 1, 48>}, {pipeline_mode = #tpu.pipeline_mode<synchronous>, transform_indices = @transform_8, window_bounds = array<i64: 1, 48>}, {pipeline_mode = #tpu.pipeline_mode<synchronous>, transform_indices = @transform_9, window_bounds = array<i64: 48, 128>}, {pipeline_mode = #tpu.pipeline_mode<synchronous>, transform_indices = @transform_10, window_bounds = array<i64: 1, 128>}, {transform_indices = @transform_11, window_bounds = array<i64: 8, 128>}, {transform_indices = @transform_12, window_bounds = array<i64: 8, 128>}, {transform_indices = @transform_13, window_bounds = array<i64: 8, 128>}]} {
    %c0 = arith.constant 0 : index
    %c0_0 = arith.constant 0 : index
    %0 = vector.load %arg2[%c0, %c0_0] : memref<8x32xf32, #tpu.memory_space<vmem>>, vector<8x32xf32>
    %cst = arith.constant dense<0.000000e+00> : vector<8xf32>
    %1 = vector.multi_reduction <add>, %0, %cst [1] : vector<8x32xf32> to vector<8xf32>
    %2 = vector.shape_cast %1 : vector<8xf32> to vector<8x1xf32>
    %cst_1 = arith.constant 3.125000e-02 : f32
    %3 = vector.broadcast %cst_1 : f32 to vector<8x1xf32>
    %4 = arith.mulf %2, %3 : vector<8x1xf32>
    %5 = arith.mulf %0, %0 : vector<8x32xf32>
    %cst_2 = arith.constant dense<0.000000e+00> : vector<8xf32>
    %6 = vector.multi_reduction <add>, %5, %cst_2 [1] : vector<8x32xf32> to vector<8xf32>
    %7 = vector.shape_cast %6 : vector<8xf32> to vector<8x1xf32>
    %cst_3 = arith.constant 3.125000e-02 : f32
    %8 = vector.broadcast %cst_3 : f32 to vector<8x1xf32>
    %9 = arith.mulf %7, %8 : vector<8x1xf32>
    %10 = arith.mulf %4, %4 : vector<8x1xf32>
    %11 = arith.subf %9, %10 : vector<8x1xf32>
    %cst_4 = arith.constant 0.000000e+00 : f32
    %12 = vector.broadcast %cst_4 : f32 to vector<8x1xf32>
    %13 = arith.maximumf %11, %12 : vector<8x1xf32>
    %14 = vector.broadcast %4 : vector<8x1xf32> to vector<8x32xf32>
    %15 = arith.subf %0, %14 : vector<8x32xf32>
    %cst_5 = arith.constant 9.99999974E-6 : f32
    %16 = vector.broadcast %cst_5 : f32 to vector<8x1xf32>
    %17 = arith.addf %13, %16 : vector<8x1xf32>
    %18 = math.rsqrt %17 : vector<8x1xf32>
    %19 = vector.broadcast %18 : vector<8x1xf32> to vector<8x32xf32>
    %20 = arith.mulf %15, %19 : vector<8x32xf32>
    %c0_6 = arith.constant 0 : index
    %c0_7 = arith.constant 0 : index
    %21 = vector.load %arg4[%c0_6, %c0_7] : memref<1x32xf32, #tpu.memory_space<vmem>>, vector<1x32xf32>
    %22 = vector.broadcast %21 : vector<1x32xf32> to vector<8x32xf32>
    %23 = arith.mulf %20, %22 : vector<8x32xf32>
    %c0_8 = arith.constant 0 : index
    %c0_9 = arith.constant 0 : index
    %24 = vector.load %arg5[%c0_8, %c0_9] : memref<1x32xf32, #tpu.memory_space<vmem>>, vector<1x32xf32>
    %25 = vector.broadcast %24 : vector<1x32xf32> to vector<8x32xf32>
    %26 = arith.addf %23, %25 : vector<8x32xf32>
    %c0_10 = arith.constant 0 : index
    %c0_11 = arith.constant 0 : index
    %27 = vector.load %arg6[%c0_10, %c0_11] : memref<32x128xf32, #tpu.memory_space<vmem>>, vector<32x128xf32>
    %cst_12 = arith.constant dense<0.000000e+00> : vector<8x128xf32>
    %28 = tpu.matmul %26, %27, %cst_12 {dimension_numbers = #tpu.dot_dimension_numbers<[1], [0], [0], [1], [0, 0, 1, 1], [], []>} : vector<8x32xf32>, vector<32x128xf32>, vector<8x128xf32> -> vector<8x128xf32>
    %c0_13 = arith.constant 0 : index
    %c0_14 = arith.constant 0 : index
    %29 = vector.load %arg7[%c0_13, %c0_14] : memref<1x128xf32, #tpu.memory_space<vmem>>, vector<1x128xf32>
    %30 = vector.broadcast %29 : vector<1x128xf32> to vector<8x128xf32>
    %31 = arith.addf %28, %30 : vector<8x128xf32>
    %c0_15 = arith.constant 0 : index
    %c0_16 = arith.constant 0 : index
    %32 = vector.load %arg3[%c0_15, %c0_16] : memref<8x48xf32, #tpu.memory_space<vmem>>, vector<8x48xf32>
    %cst_17 = arith.constant dense<0.000000e+00> : vector<8xf32>
    %33 = vector.multi_reduction <add>, %32, %cst_17 [1] : vector<8x48xf32> to vector<8xf32>
    %34 = vector.shape_cast %33 : vector<8xf32> to vector<8x1xf32>
    %cst_18 = arith.constant 0.020833334 : f32
    %35 = vector.broadcast %cst_18 : f32 to vector<8x1xf32>
    %36 = arith.mulf %34, %35 : vector<8x1xf32>
    %37 = arith.mulf %32, %32 : vector<8x48xf32>
    %cst_19 = arith.constant dense<0.000000e+00> : vector<8xf32>
    %38 = vector.multi_reduction <add>, %37, %cst_19 [1] : vector<8x48xf32> to vector<8xf32>
    %39 = vector.shape_cast %38 : vector<8xf32> to vector<8x1xf32>
    %cst_20 = arith.constant 0.020833334 : f32
    %40 = vector.broadcast %cst_20 : f32 to vector<8x1xf32>
    %41 = arith.mulf %39, %40 : vector<8x1xf32>
    %42 = arith.mulf %36, %36 : vector<8x1xf32>
    %43 = arith.subf %41, %42 : vector<8x1xf32>
    %cst_21 = arith.constant 0.000000e+00 : f32
    %44 = vector.broadcast %cst_21 : f32 to vector<8x1xf32>
    %45 = arith.maximumf %43, %44 : vector<8x1xf32>
    %46 = vector.broadcast %36 : vector<8x1xf32> to vector<8x48xf32>
    %47 = arith.subf %32, %46 : vector<8x48xf32>
    %cst_22 = arith.constant 9.99999974E-6 : f32
    %48 = vector.broadcast %cst_22 : f32 to vector<8x1xf32>
    %49 = arith.addf %45, %48 : vector<8x1xf32>
    %50 = math.rsqrt %49 : vector<8x1xf32>
    %51 = vector.broadcast %50 : vector<8x1xf32> to vector<8x48xf32>
    %52 = arith.mulf %47, %51 : vector<8x48xf32>
    %c0_23 = arith.constant 0 : index
    %c0_24 = arith.constant 0 : index
    %53 = vector.load %arg8[%c0_23, %c0_24] : memref<1x48xf32, #tpu.memory_space<vmem>>, vector<1x48xf32>
    %54 = vector.broadcast %53 : vector<1x48xf32> to vector<8x48xf32>
    %55 = arith.mulf %52, %54 : vector<8x48xf32>
    %c0_25 = arith.constant 0 : index
    %c0_26 = arith.constant 0 : index
    %56 = vector.load %arg9[%c0_25, %c0_26] : memref<1x48xf32, #tpu.memory_space<vmem>>, vector<1x48xf32>
    %57 = vector.broadcast %56 : vector<1x48xf32> to vector<8x48xf32>
    %58 = arith.addf %55, %57 : vector<8x48xf32>
    %c0_27 = arith.constant 0 : index
    %c0_28 = arith.constant 0 : index
    %59 = vector.load %arg10[%c0_27, %c0_28] : memref<48x128xf32, #tpu.memory_space<vmem>>, vector<48x128xf32>
    %cst_29 = arith.constant dense<0.000000e+00> : vector<8x128xf32>
    %60 = tpu.matmul %58, %59, %cst_29 {dimension_numbers = #tpu.dot_dimension_numbers<[1], [0], [0], [1], [0, 0, 1, 1], [], []>} : vector<8x48xf32>, vector<48x128xf32>, vector<8x128xf32> -> vector<8x128xf32>
    %c0_30 = arith.constant 0 : index
    %c0_31 = arith.constant 0 : index
    %61 = vector.load %arg11[%c0_30, %c0_31] : memref<1x128xf32, #tpu.memory_space<vmem>>, vector<1x128xf32>
    %62 = vector.broadcast %61 : vector<1x128xf32> to vector<8x128xf32>
    %63 = arith.addf %60, %62 : vector<8x128xf32>
    %c0_32 = arith.constant 0 : index
    %64 = memref.load %arg1[%c0_32] : memref<2xf32, #tpu.memory_space<smem>>
    %c1 = arith.constant 1 : index
    %65 = memref.load %arg1[%c1] : memref<2xf32, #tpu.memory_space<smem>>
    %c0_33 = arith.constant 0 : index
    %c0_34 = arith.constant 0 : index
    %66 = vector.load %arg13[%c0_33, %c0_34] : memref<8x128xf32, #tpu.memory_space<vmem>>, vector<8x128xf32>
    tpu.vector_store %arg13[%c0_33, %c0_34], %31 {strides = array<i32>} : memref<8x128xf32, #tpu.memory_space<vmem>>, vector<8x128xf32>,
    %c0_35 = arith.constant 0 : index
    %c0_36 = arith.constant 0 : index
    %67 = vector.load %arg14[%c0_35, %c0_36] : memref<8x128xf32, #tpu.memory_space<vmem>>, vector<8x128xf32>
    tpu.vector_store %arg14[%c0_35, %c0_36], %63 {strides = array<i32>} : memref<8x128xf32, #tpu.memory_space<vmem>>, vector<8x128xf32>,
    %68 = vector.broadcast %64 : f32 to vector<8x128xf32>
    %69 = arith.mulf %68, %31 : vector<8x128xf32>
    %70 = vector.broadcast %65 : f32 to vector<8x128xf32>
    %71 = arith.mulf %70, %63 : vector<8x128xf32>
    %72 = arith.addf %69, %71 : vector<8x128xf32>
    %c0_37 = arith.constant 0 : index
    %c0_38 = arith.constant 0 : index
    %73 = vector.load %arg12[%c0_37, %c0_38] : memref<8x128xf32, #tpu.memory_space<vmem>>, vector<8x128xf32>
    tpu.vector_store %arg12[%c0_37, %c0_38], %72 {strides = array<i32>} : memref<8x128xf32, #tpu.memory_space<vmem>>, vector<8x128xf32>,
    return
  }
  func.func @transform_0(%arg0: i32) -> i32 {
    %c0_i32 = arith.constant 0 : i32
    %c0_i32_0 = arith.constant 0 : i32
    return %c0_i32 : i32
  }
  func.func @transform_1(%arg0: i32) -> (i32, i32) {
    %c0_i32 = arith.constant 0 : i32
    %c0_i32_0 = arith.constant 0 : i32
    return %arg0, %c0_i32 : i32, i32
  }
  func.func @transform_2(%arg0: i32) -> (i32, i32) {
    %c0_i32 = arith.constant 0 : i32
    %c0_i32_0 = arith.constant 0 : i32
    return %arg0, %c0_i32 : i32, i32
  }
  func.func @transform_3(%arg0: i32) -> (i32, i32) {
    %c0_i32 = arith.constant 0 : i32
    %c0_i32_0 = arith.constant 0 : i32
    %c0_i32_1 = arith.constant 0 : i32
    return %c0_i32, %c0_i32_0 : i32, i32
  }
  func.func @transform_4(%arg0: i32) -> (i32, i32) {
    %c0_i32 = arith.constant 0 : i32
    %c0_i32_0 = arith.constant 0 : i32
    %c0_i32_1 = arith.constant 0 : i32
    return %c0_i32, %c0_i32_0 : i32, i32
  }
  func.func @transform_5(%arg0: i32) -> (i32, i32) {
    %c0_i32 = arith.constant 0 : i32
    %c0_i32_0 = arith.constant 0 : i32
    %c0_i32_1 = arith.constant 0 : i32
    return %c0_i32, %c0_i32_0 : i32, i32
  }
  func.func @transform_6(%arg0: i32) -> (i32, i32) {
    %c0_i32 = arith.constant 0 : i32
    %c0_i32_0 = arith.constant 0 : i32
    %c0_i32_1 = arith.constant 0 : i32
    return %c0_i32, %c0_i32_0 : i32, i32
  }
  func.func @transform_7(%arg0: i32) -> (i32, i32) {
    %c0_i32 = arith.constant 0 : i32
    %c0_i32_0 = arith.constant 0 : i32
    %c0_i32_1 = arith.constant 0 : i32
    return %c0_i32, %c0_i32_0 : i32, i32
  }
  func.func @transform_8(%arg0: i32) -> (i32, i32) {
    %c0_i32 = arith.constant 0 : i32
    %c0_i32_0 = arith.constant 0 : i32
    %c0_i32_1 = arith.constant 0 : i32
    return %c0_i32, %c0_i32_0 : i32, i32
  }
  func.func @transform_9(%arg0: i32) -> (i32, i32) {
    %c0_i32 = arith.constant 0 : i32
    %c0_i32_0 = arith.constant 0 : i32
    %c0_i32_1 = arith.constant 0 : i32
    return %c0_i32, %c0_i32_0 : i32, i32
  }
  func.func @transform_10(%arg0: i32) -> (i32, i32) {
    %c0_i32 = arith.constant 0 : i32
    %c0_i32_0 = arith.constant 0 : i32
    %c0_i32_1 = arith.constant 0 : i32
    return %c0_i32, %c0_i32_0 : i32, i32
  }
  func.func @transform_11(%arg0: i32) -> (i32, i32) {
    %c0_i32 = arith.constant 0 : i32
    %c0_i32_0 = arith.constant 0 : i32
    return %arg0, %c0_i32 : i32, i32
  }
  func.func @transform_12(%arg0: i32) -> (i32, i32) {
    %c0_i32 = arith.constant 0 : i32
    %c0_i32_0 = arith.constant 0 : i32
    return %arg0, %c0_i32 : i32, i32
  }
  func.func @transform_13(%arg0: i32) -> (i32, i32) {
    %c0_i32 = arith.constant 0 : i32
    %c0_i32_0 = arith.constant 0 : i32
    return %arg0, %c0_i32 : i32, i32
  }
}

</mosaic_0001>

<llo_original>
// kernel: tpu_custom_call.1
$region0: #{tpu_custom_call.1}
  #allocation0 [shape = 'u32[]', space=smem, size = 0x4, offset = 0x4, fixed_abs, tag = 'smem constant byte address 0x4 - core index']
  #allocation1 [shape = 'u32[144,128]{1,0:T(1,128)}', space=vmem, size = 0x12000, scoped, tag = 'internal scratch']
  %s0 = inlined_call_operand.hbm [shape: f32[2], index: 0, kind: input, shape index: {}]
  %s1 = inlined_call_operand.hbm [shape: f32[6,32], index: 1, kind: input, shape index: {}]
  %s2 = inlined_call_operand.hbm [shape: f32[6,48], index: 2, kind: input, shape index: {}]
  %s3 = inlined_call_operand.vmem [shape: f32[1,32], index: 3, kind: input, shape index: {}]
  %s4 = inlined_call_operand.vmem [shape: f32[1,32], index: 4, kind: input, shape index: {}]
  %s5 = inlined_call_operand.hbm [shape: f32[32,128], index: 5, kind: input, shape index: {}]
  %s6 = inlined_call_operand.vmem [shape: f32[1,128], index: 6, kind: input, shape index: {}]
  %s7 = inlined_call_operand.vmem [shape: f32[1,48], index: 7, kind: input, shape index: {}]
  %s8 = inlined_call_operand.vmem [shape: f32[1,48], index: 8, kind: input, shape index: {}]
  %s9 = inlined_call_operand.hbm [shape: f32[48,128], index: 9, kind: input, shape index: {}]
  %s10 = inlined_call_operand.vmem [shape: f32[1,128], index: 10, kind: input, shape index: {}]
  %s11 = inlined_call_operand.hbm [shape: f32[6,128], index: 11, kind: output, shape index: {0}]
  %s12 = inlined_call_operand.hbm [shape: f32[6,128], index: 12, kind: output, shape index: {1}]
  %s13 = inlined_call_operand.hbm [shape: f32[6,128], index: 13, kind: output, shape index: {2}]
  %14 = xla_tuple %s11, %s12, %s13
  %s15 = sld [smem:[#allocation0]]
  $region90: #{tpu_custom_call.1} parent=0
    _
  %s17 = ssub.s32 1, %s15
  %s18 = scalar_select 0, %s17, %s15
  $region1: #{tpu_custom_call.1} parent=0
    #allocation2 [shape = 'u8[512]{0}', space=smem, size = 0x200, scoped, tag = 'input window, operand 0, single buffered']
    #allocation3 [shape = 's32[1]{0}', space=sflag, size = 0x4, scoped, tag = 'scoped memory for tpu_custom_call.1']
    #allocation4 [shape = 's32[1]{0}', space=sflag, size = 0x4, scoped, tag = 'scoped memory for tpu_custom_call.1']
    #allocation5 [shape = 's32[1]{0}', space=sflag, size = 0x4, scoped, tag = 'scoped memory for tpu_custom_call.1']
    #allocation6 [shape = 'u8[4096]{0}', space=vmem, size = 0x1000, scoped, tag = 'input window, operand 1, single buffered']
    #allocation7 [shape = 'u8[4096]{0}', space=vmem, size = 0x1000, scoped, tag = 'input window, operand 2, single buffered']
    #allocation8 [shape = 's32[1]{0}', space=sflag, size = 0x4, scoped, tag = 'scoped memory for tpu_custom_call.1']
    #allocation9 [shape = 'u8[16384]{0}', space=vmem, size = 0x4000, scoped, tag = 'input window, operand 5, single buffered']
    #allocation10 [shape = 'u8[24576]{0}', space=vmem, size = 0x6000, scoped, tag = 'input window, operand 9, single buffered']
    #allocation11 [shape = 's32[1]{0}', space=sflag, size = 0x4, scoped, tag = 'scoped memory for tpu_custom_call.1']
    #allocation12 [shape = 'u8[4096]{0}', space=vmem, size = 0x1000, scoped, tag = 'output window, operand 0, single buffered']
    #allocation13 [shape = 'u8[4096]{0}', space=vmem, size = 0x1000, scoped, tag = 'output window, operand 1, single buffered']
    #allocation14 [shape = 's32[1]{0}', space=sflag, size = 0x4, scoped, tag = 'scoped memory for tpu_custom_call.1']
    #allocation15 [shape = 'u8[4096]{0}', space=vmem, size = 0x1000, scoped, tag = 'output window, operand 2, single buffered']
    %19 = vsyncpa [#allocation5], 0
    %20 = vsyncpa [#allocation3], 0
    %21 = vsyncpa [#allocation8], 0
    %22 = vsyncpa [#allocation11], 0
    %23 = vsyncpa [#allocation4], 0
    %24 = vsyncpa [#allocation14], 0
    // Predicated region
    $region2: #{tpu_custom_call.1} parent=1 // pred_check
      _
    $region3: #{tpu_custom_call.1} parent=1 // pred_check_branch
      %26 = sbr.rel (0) target = $region5
    $region4: #{tpu_custom_call.1} parent=1 // pred_region
      %s28 = ssub.s32 16, 16
      %29 = vsyncadd [#allocation5], %s28
      %32 = dma.hbm_to_smem %s0, 16, [#allocation2], [#allocation5]
    $region5: #{tpu_custom_call.1} parent=1 // pred_fallthru
      _
    // Predicated region
    $region6: #{tpu_custom_call.1} parent=1 // pred_check
      _
    $region7: #{tpu_custom_call.1} parent=1 // pred_check_branch
      %34 = sbr.rel (0) target = $region9
    $region8: #{tpu_custom_call.1} parent=1 // pred_region
      %s36 = ssub.s32 128, 128
      %37 = vsyncadd [#allocation3], %s36
      %s39 = sshll.u32 [#allocation6], 4
      %s40 = int_to_ptr.vmem [resolvable:$true] %s39
      %42 = dma.hbm_to_vmem [thread:$0]  %s1, 128, %s40, [#allocation3]
    $region9: #{tpu_custom_call.1} parent=1 // pred_fallthru
      _
    // Predicated region
    $region10: #{tpu_custom_call.1} parent=1 // pred_check
      _
    $region11: #{tpu_custom_call.1} parent=1 // pred_check_branch
      %44 = sbr.rel (0) target = $region13
    $region12: #{tpu_custom_call.1} parent=1 // pred_region
      %s46 = ssub.s32 128, 128
      %47 = vsyncadd [#allocation8], %s46
      %s49 = sshll.u32 [#allocation7], 4
      %s50 = int_to_ptr.vmem [resolvable:$true] %s49
      %52 = dma.hbm_to_vmem [thread:$0]  %s2, 128, %s50, [#allocation8]
    $region13: #{tpu_custom_call.1} parent=1 // pred_fallthru
      _
    // Predicated region
    $region14: #{tpu_custom_call.1} parent=1 // pred_check
      _
    $region15: #{tpu_custom_call.1} parent=1 // pred_check_branch
      %54 = sbr.rel (0) target = $region17
    $region16: #{tpu_custom_call.1} parent=1 // pred_region
      _
    $region17: #{tpu_custom_call.1} parent=1 // pred_fallthru
      _
    // Predicated region
    $region18: #{tpu_custom_call.1} parent=1 // pred_check
      _
    $region19: #{tpu_custom_call.1} parent=1 // pred_check_branch
      %56 = sbr.rel (0) target = $region21
    $region20: #{tpu_custom_call.1} parent=1 // pred_region
      _
    $region21: #{tpu_custom_call.1} parent=1 // pred_fallthru
      _
    // Predicated region
    $region22: #{tpu_custom_call.1} parent=1 // pred_check
      _
    $region23: #{tpu_custom_call.1} parent=1 // pred_check_branch
      %58 = sbr.rel (0) target = $region25
    $region24: #{tpu_custom_call.1} parent=1 // pred_region
      %s60 = ssub.s32 512, 512
      %61 = vsyncadd [#allocation8], %s60
      %s62 = sshll.u32 [#allocation9], 4
      %s63 = int_to_ptr.vmem [resolvable:$true] %s62
      %68 = dma.hbm_to_vmem [thread:$0]  %s5, 512, %s63, [#allocation8], 128, 128, 8
    $region25: #{tpu_custom_call.1} parent=1 // pred_fallthru
      _
    // Predicated region
    $region26: #{tpu_custom_call.1} parent=1 // pred_check
      _
    $region27: #{tpu_custom_call.1} parent=1 // pred_check_branch
      %70 = sbr.rel (0) target = $region29
    $region28: #{tpu_custom_call.1} parent=1 // pred_region
      _
    $region29: #{tpu_custom_call.1} parent=1 // pred_fallthru
      _
    // Predicated region
    $region30: #{tpu_custom_call.1} parent=1 // pred_check
      _
    $region31: #{tpu_custom_call.1} parent=1 // pred_check_branch
      %72 = sbr.rel (0) target = $region33
    $region32: #{tpu_custom_call.1} parent=1 // pred_region
      _
    $region33: #{tpu_custom_call.1} parent=1 // pred_fallthru
      _
    // Predicated region
    $region34: #{tpu_custom_call.1} parent=1 // pred_check
      _
    $region35: #{tpu_custom_call.1} parent=1 // pred_check_branch
      %74 = sbr.rel (0) target = $region37
    $region36: #{tpu_custom_call.1} parent=1 // pred_region
      _
    $region37: #{tpu_custom_call.1} parent=1 // pred_fallthru
      _
    // Predicated region
    $region38: #{tpu_custom_call.1} parent=1 // pred_check
      _
    $region39: #{tpu_custom_call.1} parent=1 // pred_check_branch
      %76 = sbr.rel (0) target = $region41
    $region40: #{tpu_custom_call.1} parent=1 // pred_region
      %s78 = ssub.s32 768, 768
      %79 = vsyncadd [#allocation11], %s78
      %s80 = sshll.u32 [#allocation10], 4
      %s81 = int_to_ptr.vmem [resolvable:$true] %s80
      %86 = dma.hbm_to_vmem [thread:$0]  %s9, 768, %s81, [#allocation11], 128, 128, 8
    $region41: #{tpu_custom_call.1} parent=1 // pred_fallthru
      _
    // Predicated region
    $region42: #{tpu_custom_call.1} parent=1 // pred_check
      _
    $region43: #{tpu_custom_call.1} parent=1 // pred_check_branch
      %88 = sbr.rel (0) target = $region45
    $region44: #{tpu_custom_call.1} parent=1 // pred_region
      _
    $region45: #{tpu_custom_call.1} parent=1 // pred_fallthru
      _
    // Predicated region
    $region46: #{tpu_custom_call.1} parent=1 // pred_check
      _
    $region47: #{tpu_custom_call.1} parent=1 // pred_check_branch
      %90 = sbr.rel (0) target = $region49
    $region48: #{tpu_custom_call.1} parent=1 // pred_region
      %91 = dma.done [#allocation5], 16
    $region49: #{tpu_custom_call.1} parent=1 // pred_fallthru
      _
    // Predicated region
    $region50: #{tpu_custom_call.1} parent=1 // pred_check
      _
    $region51: #{tpu_custom_call.1} parent=1 // pred_check_branch
      %93 = sbr.rel (0) target = $region53
    $region52: #{tpu_custom_call.1} parent=1 // pred_region
      %94 = dma.done [#allocation3], 128
    $region53: #{tpu_custom_call.1} parent=1 // pred_fallthru
      _
    // Predicated region
    $region54: #{tpu_custom_call.1} parent=1 // pred_check
      _
    $region55: #{tpu_custom_call.1} parent=1 // pred_check_branch
      %96 = sbr.rel (0) target = $region57
    $region56: #{tpu_custom_call.1} parent=1 // pred_region
      %97 = dma.done [#allocation8], 128
    $region57: #{tpu_custom_call.1} parent=1 // pred_fallthru
      _
    // Predicated region
    $region58: #{tpu_custom_call.1} parent=1 // pred_check
      _
    $region59: #{tpu_custom_call.1} parent=1 // pred_check_branch
      %99 = sbr.rel (0) target = $region61
    $region60: #{tpu_custom_call.1} parent=1 // pred_region
      %100 = dma.done [#allocation8], 512
    $region61: #{tpu_custom_call.1} parent=1 // pred_fallthru
      _
    // Predicated region
    $region62: #{tpu_custom_call.1} parent=1 // pred_check
      _
    $region63: #{tpu_custom_call.1} parent=1 // pred_check_branch
      %102 = sbr.rel (0) target = $region65
    $region64: #{tpu_custom_call.1} parent=1 // pred_region
      %103 = dma.done [#allocation11], 768
    $region65: #{tpu_custom_call.1} parent=1 // pred_fallthru
      _
    %104 = sfence
    %v105 = vld [vmem:[#allocation6] sm:$0xff]
    %vm106 = vcmask 261120
    %v107 = vsel %vm106, %v105, 0.0
    %108 = vadd.xlane.f32.xlu0 %v107
    %v109 = vpop.xlane.xlu0 %108
    %v110 = vmul.f32 %v109, 0.03125
    %v111 = vmul.f32 %v105, %v105
    %v112 = vsel %vm106, %v111, 0.0
    %113 = vadd.xlane.f32.xlu0 %v112
    %v114 = vpop.xlane.xlu0 %113
    %v115 = vmul.f32 %v114, 0.03125
    %v116 = vmul.f32 %v110, %v110
    %v117 = vsub.f32 %v115, %v116
    %v118 = vmax.f32 %v117, 0.0
    %v119 = vsub.f32 %v105, %v110
    %v120 = vadd.f32 %v118, 1e-05
    %v121 = vrsqrt.pop %v120
    %v122 = vmul.f32 %v119, %v121
    %v123 = vld [vmem:[%s3] sm:$0x1]
    %v125 = vlaneseq
    %v126 = vshrl.u32 %v125, 7
    %v127 = vsub.s32 0, %v126
    %v128 = vrot.slane %v123, %v127
    %v130 = vmul.f32 %v122, %v128
    %v131 = vld [vmem:[%s4] sm:$0x1]
    %v133 = vlaneseq
    %v134 = vshrl.u32 %v133, 7
    %v135 = vsub.s32 0, %v134
    %v136 = vrot.slane %v131, %v135
    %v138 = vadd.f32 %v130, %v136
    %v139 = vld [vmem:[#allocation9] sm:$0xff]
    %v140 = vld [vmem:[#allocation9 + $0x8] sm:$0xff]
    %v141 = vld [vmem:[#allocation9 + $0x10] sm:$0xff]
    %v142 = vld [vmem:[#allocation9 + $0x18] sm:$0xff]
    %v143 = vld [vmem:[%s6] sm:$0x1]
    %v145 = vlaneseq
    %v146 = vshrl.u32 %v145, 7
    %v147 = vsub.s32 0, %v146
    %v148 = vrot.slane %v143, %v147
    %v151 = vsel %vm106, %v138, 0
    %153 = vmatprep.subr.mxu0 0.0
    %154 = vmatpush1.msra.mxu0 0.0
    %155 = vmatprep.subr.mxu0 0.0
    %156 = vmatpush1.msra.mxu0 0.0
    %157 = vmatprep.subr.mxu0 0.0
    %158 = vmatpush1.msra.mxu0 0.0
    %159 = vmatprep.subr.mxu0 0.0
    %160 = vmatpush1.msra.mxu0 0.0
    %161 = vmatprep.subr.mxu0 0.0
    %162 = vmatpush1.msra.mxu0 0.0
    %163 = vmatprep.subr.mxu0 0.0
    %164 = vmatpush1.msra.mxu0 0.0
    %165 = vmatprep.subr.mxu0 0.0
    %166 = vmatpush1.msra.mxu0 0.0
    %167 = vmatprep.subr.mxu0 0.0
    %168 = vmatpush1.msra.mxu0 0.0
    %169 = vmatprep.subr.mxu0 0.0
    %170 = vmatpush1.msra.mxu0 0.0
    %171 = vmatprep.subr.mxu0 0.0
    %172 = vmatpush1.msra.mxu0 0.0
    %173 = vmatprep.subr.mxu0 0.0
    %174 = vmatpush1.msra.mxu0 0.0
    %175 = vmatprep.subr.mxu0 0.0
    %176 = vmatpush1.msra.mxu0 0.0
    %177 = vmatprep.subr.mxu0 0.0
    %178 = vmatpush1.msra.mxu0 %v142
    %179 = vmatprep.subr.mxu0 0.0
    %180 = vmatpush1.msra.mxu0 %v141
    %181 = vmatprep.subr.mxu0 0.0
    %182 = vmatpush1.msra.mxu0 %v140
    %183 = vmatprep.subr.mxu0 0.0
    %184 = vmatpush1.msra.mxu0 %v139
    %185 = vmatprep.subr.mxu0 0.0
    %186 = vmatpush2.msra.mxu0 0.0
    %187 = vmatprep.subr.mxu0 0.0
    %188 = vmatpush2.msra.mxu0 0.0
    %189 = vmatprep.subr.mxu0 0.0
    %190 = vmatpush2.msra.mxu0 0.0
    %191 = vmatprep.subr.mxu0 0.0
    %192 = vmatpush2.msra.mxu0 0.0
    %193 = vmatprep.subr.mxu0 0.0
    %194 = vmatpush2.msra.mxu0 0.0
    %195 = vmatprep.subr.mxu0 0.0
    %196 = vmatpush2.msra.mxu0 0.0
    %197 = vmatprep.subr.mxu0 0.0
    %198 = vmatpush2.msra.mxu0 0.0
    %199 = vmatprep.subr.mxu0 0.0
    %200 = vmatpush2.msra.mxu0 0.0
    %201 = vmatprep.subr.mxu0 0.0
    %202 = vmatpush2.msra.mxu0 0.0
    %203 = vmatprep.subr.mxu0 0.0
    %204 = vmatpush2.msra.mxu0 0.0
    %205 = vmatprep.subr.mxu0 0.0
    %206 = vmatpush2.msra.mxu0 0.0
    %207 = vmatprep.subr.mxu0 0.0
    %208 = vmatpush2.msra.mxu0 0.0
    %209 = vmatprep.subr.mxu0 0.0
    %210 = vmatpush2.msra.mxu0 0.0
    %211 = vmatprep.subr.mxu0 0.0
    %212 = vmatpush2.msra.mxu0 0.0
    %213 = vmatprep.subr.mxu0 0.0
    %214 = vmatpush2.msra.mxu0 0.0
    %215 = vmatprep.subr.mxu0 0.0
    %216 = vmatpush2.msra.mxu0 0.0
    %217 = vmatprep.mubr.f32.mxu0 0.0
    %218 = vmatmul.mubr.f32.gmra.mxu0 %v151
    %v219 = vpop.f32.mrf.mxu0
    %v220 = vadd.f32 %v148, %v219
    %v221 = vpop.f32.mrf.mxu0
    %222 = vdwg.mxu0
    %v223 = vld [vmem:[#allocation7] sm:$0xff]
    %vm224 = vcmask 392192
    %v225 = vsel %vm224, %v223, 0.0
    %226 = vadd.xlane.f32.xlu0 %v225
    %v227 = vpop.xlane.xlu0 %226
    %v228 = vmul.f32 %v227, 0.020833334
    %v229 = vmul.f32 %v223, %v223
    %v230 = vsel %vm224, %v229, 0.0
    %231 = vadd.xlane.f32.xlu0 %v230
    %v232 = vpop.xlane.xlu0 %231
    %v233 = vmul.f32 %v232, 0.020833334
    %v234 = vmul.f32 %v228, %v228
    %v235 = vsub.f32 %v233, %v234
    %v236 = vmax.f32 %v235, 0.0
    %v237 = vsub.f32 %v223, %v228
    %v238 = vadd.f32 %v236, 1e-05
    %v239 = vrsqrt.pop %v238
    %v240 = vmul.f32 %v237, %v239
    %v241 = vld [vmem:[%s7] sm:$0x1]
    %v243 = vlaneseq
    %v244 = vshrl.u32 %v243, 7
    %v245 = vsub.s32 0, %v244
    %v246 = vrot.slane %v241, %v245
    %v248 = vmul.f32 %v240, %v246
    %v249 = vld [vmem:[%s8] sm:$0x1]
    %v251 = vlaneseq
    %v252 = vshrl.u32 %v251, 7
    %v253 = vsub.s32 0, %v252
    %v254 = vrot.slane %v249, %v253
    %v256 = vadd.f32 %v248, %v254
    %v257 = vld [vmem:[#allocation10] sm:$0xff]
    %v258 = vld [vmem:[#allocation10 + $0x8] sm:$0xff]
    %v259 = vld [vmem:[#allocation10 + $0x10] sm:$0xff]
    %v260 = vld [vmem:[#allocation10 + $0x18] sm:$0xff]
    %v261 = vld [vmem:[#allocation10 + $0x20] sm:$0xff]
    %v262 = vld [vmem:[#allocation10 + $0x28] sm:$0xff]
    %v263 = vld [vmem:[%s10] sm:$0x1]
    %v265 = vlaneseq
    %v266 = vshrl.u32 %v265, 7
    %v267 = vsub.s32 0, %v266
    %v268 = vrot.slane %v263, %v267
    %v271 = vsel %vm224, %v256, 0
    %273 = vmatprep.subr.mxu0 0.0
    %274 = vmatpush1.msra.mxu0 0.0
    %275 = vmatprep.subr.mxu0 0.0
    %276 = vmatpush1.msra.mxu0 0.0
    %277 = vmatprep.subr.mxu0 0.0
    %278 = vmatpush1.msra.mxu0 0.0
    %279 = vmatprep.subr.mxu0 0.0
    %280 = vmatpush1.msra.mxu0 0.0
    %281 = vmatprep.subr.mxu0 0.0
    %282 = vmatpush1.msra.mxu0 0.0
    %283 = vmatprep.subr.mxu0 0.0
    %284 = vmatpush1.msra.mxu0 0.0
    %285 = vmatprep.subr.mxu0 0.0
    %286 = vmatpush1.msra.mxu0 0.0
    %287 = vmatprep.subr.mxu0 0.0
    %288 = vmatpush1.msra.mxu0 0.0
    %289 = vmatprep.subr.mxu0 0.0
    %290 = vmatpush1.msra.mxu0 0.0
    %291 = vmatprep.subr.mxu0 0.0
    %292 = vmatpush1.msra.mxu0 0.0
    %293 = vmatprep.subr.mxu0 0.0
    %294 = vmatpush1.msra.mxu0 %v262
    %295 = vmatprep.subr.mxu0 0.0
    %296 = vmatpush1.msra.mxu0 %v261
    %297 = vmatprep.subr.mxu0 0.0
    %298 = vmatpush1.msra.mxu0 %v260
    %299 = vmatprep.subr.mxu0 0.0
    %300 = vmatpush1.msra.mxu0 %v259
    %301 = vmatprep.subr.mxu0 0.0
    %302 = vmatpush1.msra.mxu0 %v258
    %303 = vmatprep.subr.mxu0 0.0
    %304 = vmatpush1.msra.mxu0 %v257
    %305 = vmatprep.subr.mxu0 0.0
    %306 = vmatpush2.msra.mxu0 0.0
    %307 = vmatprep.subr.mxu0 0.0
    %308 = vmatpush2.msra.mxu0 0.0
    %309 = vmatprep.subr.mxu0 0.0
    %310 = vmatpush2.msra.mxu0 0.0
    %311 = vmatprep.subr.mxu0 0.0
    %312 = vmatpush2.msra.mxu0 0.0
    %313 = vmatprep.subr.mxu0 0.0
    %314 = vmatpush2.msra.mxu0 0.0
    %315 = vmatprep.subr.mxu0 0.0
    %316 = vmatpush2.msra.mxu0 0.0
    %317 = vmatprep.subr.mxu0 0.0
    %318 = vmatpush2.msra.mxu0 0.0
    %319 = vmatprep.subr.mxu0 0.0
    %320 = vmatpush2.msra.mxu0 0.0
    %321 = vmatprep.subr.mxu0 0.0
    %322 = vmatpush2.msra.mxu0 0.0
    %323 = vmatprep.subr.mxu0 0.0
    %324 = vmatpush2.msra.mxu0 0.0
    %325 = vmatprep.subr.mxu0 0.0
    %326 = vmatpush2.msra.mxu0 0.0
    %327 = vmatprep.subr.mxu0 0.0
    %328 = vmatpush2.msra.mxu0 0.0
    %329 = vmatprep.subr.mxu0 0.0
    %330 = vmatpush2.msra.mxu0 0.0
    %331 = vmatprep.subr.mxu0 0.0
    %332 = vmatpush2.msra.mxu0 0.0
    %333 = vmatprep.subr.mxu0 0.0
    %334 = vmatpush2.msra.mxu0 0.0
    %335 = vmatprep.subr.mxu0 0.0
    %336 = vmatpush2.msra.mxu0 0.0
    %337 = vmatprep.mubr.f32.mxu0 0.0
    %338 = vmatmul.mubr.f32.gmra.mxu0 %v271
    %v339 = vpop.f32.mrf.mxu0
    %v340 = vadd.f32 %v268, %v339
    %v341 = vpop.f32.mrf.mxu0
    %342 = vdwg.mxu0
    %s343 = sld [smem:[#allocation2]]
    %s344 = sld [smem:[#allocation2 + $0x1]]
    %345 = vst [vmem:[#allocation13] sm:$0xff] %v220
    %346 = vst [vmem:[#allocation15] sm:$0xff] %v340
    %v347 = vstv %s343
    %v348 = vmul.f32 %v347, %v220
    %v349 = vstv %s344
    %v350 = vmul.f32 %v349, %v340
    %v351 = vadd.f32 %v348, %v350
    %352 = vst [vmem:[#allocation12] sm:$0xff] %v351
    // Predicated region
    $region66: #{tpu_custom_call.1} parent=1 // pred_check
      _
    $region67: #{tpu_custom_call.1} parent=1 // pred_check_branch
      %354 = sbr.rel (0) target = $region69
    $region68: #{tpu_custom_call.1} parent=1 // pred_region
      %s356 = ssub.s32 128, 128
      %357 = vsyncadd [#allocation4], %s356
      %s359 = sshll.u32 [#allocation12], 4
      %s360 = int_to_ptr.vmem [resolvable:$true] %s359
      %362 = dma.vmem_to_hbm [thread:$0]  %s360, 128, %s11, [#allocation4]
    $region69: #{tpu_custom_call.1} parent=1 // pred_fallthru
      _
    // Predicated region
    $region70: #{tpu_custom_call.1} parent=1 // pred_check
      _
    $region71: #{tpu_custom_call.1} parent=1 // pred_check_branch
      %364 = sbr.rel (0) target = $region73
    $region72: #{tpu_custom_call.1} parent=1 // pred_region
      %s366 = ssub.s32 128, 128
      %367 = vsyncadd [#allocation14], %s366
      %s369 = sshll.u32 [#allocation13], 4
      %s370 = int_to_ptr.vmem [resolvable:$true] %s369
      %372 = dma.vmem_to_hbm [thread:$0]  %s370, 128, %s12, [#allocation14]
    $region73: #{tpu_custom_call.1} parent=1 // pred_fallthru
      _
    // Predicated region
    $region74: #{tpu_custom_call.1} parent=1 // pred_check
      _
    $region75: #{tpu_custom_call.1} parent=1 // pred_check_branch
      %374 = sbr.rel (0) target = $region77
    $region76: #{tpu_custom_call.1} parent=1 // pred_region
      %s376 = ssub.s32 128, 128
      %377 = vsyncadd [#allocation14], %s376
      %s379 = sshll.u32 [#allocation15], 4
      %s380 = int_to_ptr.vmem [resolvable:$true] %s379
      %382 = dma.vmem_to_hbm [thread:$0]  %s380, 128, %s13, [#allocation14]
    $region77: #{tpu_custom_call.1} parent=1 // pred_fallthru
      _
    // Predicated region
    $region78: #{tpu_custom_call.1} parent=1 // pred_check
      _
    $region79: #{tpu_custom_call.1} parent=1 // pred_check_branch
      %384 = sbr.rel (0) target = $region81
    $region80: #{tpu_custom_call.1} parent=1 // pred_region
      %385 = dma.done [#allocation4], 128
    $region81: #{tpu_custom_call.1} parent=1 // pred_fallthru
      _
    // Predicated region
    $region82: #{tpu_custom_call.1} parent=1 // pred_check
      _
    $region83: #{tpu_custom_call.1} parent=1 // pred_check_branch
      %387 = sbr.rel (0) target = $region85
    $region84: #{tpu_custom_call.1} parent=1 // pred_region
      %388 = dma.done [#allocation14], 128
    $region85: #{tpu_custom_call.1} parent=1 // pred_fallthru
      _
    // Predicated region
    $region86: #{tpu_custom_call.1} parent=1 // pred_check
      _
    $region87: #{tpu_custom_call.1} parent=1 // pred_check_branch
      %390 = sbr.rel (0) target = $region89
    $region88: #{tpu_custom_call.1} parent=1 // pred_region
      %391 = dma.done [#allocation14], 128
    $region89: #{tpu_custom_call.1} parent=1 // pred_fallthru
      _
    %392 = vsyncpa [#allocation3], 1
    %393 = vsyncpa [#allocation8], 1
    %394 = vsyncpa [#allocation11], 1
    %395 = vsyncpa [#allocation4], 1
    %396 = vsyncpa [#allocation14], 1
    %397 = vsyncpa [#allocation5], 1

</llo_original>
